<compile_context>
chip_gen: v6e
topology: v6e:2x2x1
jax: 0.10.0
libtpu: 0.0.40
codegen_flags: <defaults>
</compile_context>

<pallas_src>
import jax
import jax.numpy as jnp
from jax.experimental import pallas as pl
from jax.experimental.pallas import tpu as pltpu


def _conv_matmul_kernel(w_ref, p_ref, o_ref):
    # w_ref: (Cout, K_pad) bf16 packed conv weights (+ bias column)
    # p_ref: (K_pad, TM)   bf16 im2col patches (+ ones row), M on lanes
    # o_ref: (Cout, TM)    f32  lane-dense output block
    o_ref[...] = jnp.dot(
        w_ref[...], p_ref[...], preferred_element_type=jnp.float32
    ).astype(o_ref.dtype)


def conv2d_3x3_pallas(x_nchw, weight, bias, *, tm=4096):
    """nn.Conv2d(Cin, Cout, 3, padding=1) forward.

    x_nchw: (N, Cin, H, W); weight: (Cout, Cin, 3, 3); bias: (Cout,).
    Returns (N, Cout, H, W), matching PyTorch.
    """
    N, Cin, H, W = x_nchw.shape
    Cout = weight.shape[0]
    K = 9 * Cin                         # 27 for Cin=3
    K_pad = ((K + 1 + 7) // 8) * 8      # +1 bias column, padded to sublane multiple
    M = N * H * W

    # --- block / grid sizing: M on lanes, tm a multiple of 128, >=2 blocks when
    # --- M allows it (feeds both v7x TensorCores). ---
    tm = max(128, min(tm, pl.cdiv(pl.cdiv(M, 2), 128) * 128))
    m_pad = pl.cdiv(M, tm) * tm

    # --- im2col in the wrapper, built directly as (K, M) so M lands on lanes ---
    x_sp = jnp.pad(x_nchw, ((0, 0), (0, 0), (1, 1), (1, 1)))          # spatial halo
    taps = [x_sp[:, :, kh:kh + H, kw:kw + W] for kh in range(3) for kw in range(3)]
    # (9, N, Cin, H, W) -> (9, Cin, N, H, W) -> (K, M); K order = (kh, kw, cin)
    patches = jnp.stack(taps).transpose(0, 2, 1, 3, 4).reshape(K, M)
    ones_row = jnp.ones((1, M), patches.dtype)                        # bias indicator
    patches = jnp.concatenate([patches, ones_row], axis=0)            # (K+1, M)
    patches = jnp.pad(patches, ((0, K_pad - K - 1), (0, m_pad - M)))
    patches = patches.astype(jnp.bfloat16)

    # weight (Cout, Cin, 3, 3) -> (Cout, K) in (kh, kw, cin) order; bias in col K
    w = jnp.transpose(weight, (0, 2, 3, 1)).reshape(Cout, K)
    w = jnp.concatenate([w, bias.reshape(Cout, 1)], axis=1)           # (Cout, K+1)
    w = jnp.pad(w, ((0, 0), (0, K_pad - K - 1))).astype(jnp.bfloat16)

    bf16_bytes = 2
    f32_bytes = 4
    cost = pl.CostEstimate(
        flops=2 * m_pad * K_pad * Cout,
        transcendentals=0,
        bytes_accessed=(K_pad * m_pad * bf16_bytes          # patch stream
                        + Cout * K_pad * bf16_bytes         # weights (once)
                        + Cout * m_pad * f32_bytes),         # output stream
    )

    out_flat = pl.pallas_call(
        _conv_matmul_kernel,
        out_shape=jax.ShapeDtypeStruct((Cout, m_pad), jnp.float32),
        grid_spec=pltpu.PrefetchScalarGridSpec(
            num_scalar_prefetch=0,
            grid=(m_pad // tm,),
            in_specs=[
                pl.BlockSpec((Cout, K_pad), lambda i: (0, 0)),   # weights, resident
                pl.BlockSpec((K_pad, tm), lambda i: (0, i)),     # patches, streamed
            ],
            out_specs=pl.BlockSpec((Cout, tm), lambda i: (0, i)),  # lane-dense out
        ),
        compiler_params=pltpu.CompilerParams(
            dimension_semantics=("parallel",),
        ),
        cost_estimate=cost,
    )(w, patches)

    # (Cout, M) -> (Cout, N, H, W) -> NCHW (PyTorch output convention).
    out = out_flat[:, :M].reshape(Cout, N, H, W)
    return jnp.transpose(out, (1, 0, 2, 3)).astype(x_nchw.dtype)


if __name__ == "__main__":
    key = jax.random.PRNGKey(0)
    k_x, k_w, k_b = jax.random.split(key, 3)

    # Small shapes consistent with the module (Cin=3, Cout=64, k=3, pad=1).
    N, Cin, H, W = 2, 3, 16, 16
    Cout = 64

    x = jax.random.normal(k_x, (N, Cin, H, W), dtype=jnp.float32)
    weight = jax.random.normal(k_w, (Cout, Cin, 3, 3), dtype=jnp.float32) * 0.1
    bias = jax.random.normal(k_b, (Cout,), dtype=jnp.float32) * 0.1

    out = jax.jit(conv2d_3x3_pallas)(x, weight, bias)
    out = jax.block_until_ready(out)

    # Reference check against XLA's conv (NCHW, OIHW); bf16 operands -> loose tol.
    ref = jax.lax.conv_general_dilated(
        x, weight, window_strides=(1, 1), padding=((1, 1), (1, 1)),
        dimension_numbers=("NCHW", "OIHW", "NCHW"),
    ) + bias.reshape(1, Cout, 1, 1)
    assert out.shape == (N, Cout, H, W)
    assert jnp.allclose(out, ref, atol=5e-2, rtol=5e-2)

    print("KERNEL_OK")
</pallas_src>

<mosaic_0001>
module attributes {stable_mosaic.version = 11 : i64} {
  func.func @_conv_matmul_kernel(%arg0: i32, %arg1: memref<64x32xbf16, #tpu.memory_space<vmem>>, %arg2: memref<32x256xbf16, #tpu.memory_space<vmem>>, %arg3: memref<64x256xf32, #tpu.memory_space<vmem>>) attributes {dimension_semantics = [#tpu.dimension_semantics<parallel>], iteration_bounds = array<i64: 2>, scalar_prefetch = 0 : i64, scratch_operands = 0 : i64, tpu.core_type = #tpu.core_type<tc>, window_params = [{pipeline_mode = #tpu.pipeline_mode<synchronous>, transform_indices = @transform_0, window_bounds = array<i64: 64, 32>}, {transform_indices = @transform_1, window_bounds = array<i64: 32, 256>}, {transform_indices = @transform_2, window_bounds = array<i64: 64, 256>}]} {
    %c0 = arith.constant 0 : index
    %c0_0 = arith.constant 0 : index
    %0 = vector.load %arg1[%c0, %c0_0] : memref<64x32xbf16, #tpu.memory_space<vmem>>, vector<64x32xbf16>
    %c0_1 = arith.constant 0 : index
    %c0_2 = arith.constant 0 : index
    %1 = vector.load %arg2[%c0_1, %c0_2] : memref<32x256xbf16, #tpu.memory_space<vmem>>, vector<32x256xbf16>
    %cst = arith.constant dense<0.000000e+00> : vector<64x256xf32>
    %2 = tpu.matmul %0, %1, %cst {dimension_numbers = #tpu.dot_dimension_numbers<[1], [0], [0], [1], [0, 0, 1, 1], [], []>} : vector<64x32xbf16>, vector<32x256xbf16>, vector<64x256xf32> -> vector<64x256xf32>
    %c0_3 = arith.constant 0 : index
    %c0_4 = arith.constant 0 : index
    %3 = vector.load %arg3[%c0_3, %c0_4] : memref<64x256xf32, #tpu.memory_space<vmem>>, vector<64x256xf32>
    tpu.vector_store %arg3[%c0_3, %c0_4], %2 {strides = array<i32>} : memref<64x256xf32, #tpu.memory_space<vmem>>, vector<64x256xf32>,
    return
  }
  func.func @transform_0(%arg0: i32) -> (i32, i32) {
    %c0_i32 = arith.constant 0 : i32
    %c0_i32_0 = arith.constant 0 : i32
    %c0_i32_1 = arith.constant 0 : i32
    return %c0_i32, %c0_i32_0 : i32, i32
  }
  func.func @transform_1(%arg0: i32) -> (i32, i32) {
    %c0_i32 = arith.constant 0 : i32
    %c0_i32_0 = arith.constant 0 : i32
    return %c0_i32, %arg0 : i32, i32
  }
  func.func @transform_2(%arg0: i32) -> (i32, i32) {
    %c0_i32 = arith.constant 0 : i32
    %c0_i32_0 = arith.constant 0 : i32
    return %c0_i32, %arg0 : i32, i32
  }
}

</mosaic_0001>

<llo_original>
// kernel: conv2d_3x3_pallas.1
$region0: #{conv2d_3x3_pallas.1}
  #allocation0 [shape = 'u32[]', space=smem, size = 0x4, offset = 0x4, fixed_abs, tag = 'smem constant byte address 0x4 - core index']
  #allocation1 [shape = 'u32[144,128]{1,0:T(1,128)}', space=vmem, size = 0x12000, scoped, tag = 'internal scratch']
  %s0 = inlined_call_operand.vmem [shape: bf16[64,32], index: 0, kind: input, shape index: {}]
  %s1 = inlined_call_operand.vmem [shape: bf16[32,512], index: 1, kind: input, shape index: {}]
  %s2 = inlined_call_operand.vmem [shape: f32[64,512], index: 2, kind: output, shape index: {}]
  %s3 = sld [smem:[#allocation0]]
  $region98: #{conv2d_3x3_pallas.1} parent=0
    _
  %s5 = ssub.s32 1, %s3
  %s6 = scalar_select 0, %s5, %s3
  $region1: #{conv2d_3x3_pallas.1} parent=0
    #allocation2 [shape = 'u8[32768]{0}', space=vmem, size = 0x8000, scoped, tag = 'input window, operand 1']
    #allocation3 [shape = 'u8[131072]{0}', space=vmem, size = 0x20000, scoped, tag = 'output window, operand 0']
    loop: start=0, step=1, limit=4
    $region2: #{conv2d_3x3_pallas.1} parent=1 // loop_pre_header
      _
    $region3: #{conv2d_3x3_pallas.1} parent=1 // loop_header
      %s8 = sphi 0, %s12
      %p9 = scmp.ge.s32.totalorder %s8, 4
      %s16 = sphi 0, %s16
      %s18 = sphi 0, %s16
      %s19 = sphi 0, %s18
      %s33 = sphi 0, %s19
      %s39 = sphi 0, %s41
      %s42 = sphi 0, %s39
      %s43 = sphi 0, %s42
      %s59 = sphi 0, %s43
      %s65 = sphi 0, %s67
      %s68 = sphi 0, %s65
      %s69 = sphi 0, %s68
      %s85 = sphi 0, %s69
    $region4: #{conv2d_3x3_pallas.1} parent=1 // loop_header_branch
      %11 = sbr.rel (%p9) target = $region8
    $region5: #{conv2d_3x3_pallas.1} parent=1 // loop_body
      %s13 = ssub.s32 %s8, 1
      %s14 = ssub.s32 %s8, 2
      %s15 = sadd.s32 %s8, 1
      %s17 = sadd.s32 %s16, 1
      %p20 = scmp.eq.s32.totalorder %s8, 1
      %p21 = scmp.ne.s32.totalorder %s16, %s18
      %p22 = scmp.eq.s32.totalorder %s8, 0
      %p23 = por %p21, %p22
      %p24 = scmp.ne.s32.totalorder %s16, %s18
      %p25 = scmp.eq.s32.totalorder %s13, 1
      %p26 = por %p24, %p25
      %p27 = scmp.ne.s32.totalorder %s18, %s19
      %p28 = scmp.eq.s32.totalorder %s13, 0
      %p29 = por %p27, %p28
      %p30 = scmp.ne.s32.totalorder %s18, %s19
      %p31 = scmp.eq.s32.totalorder %s14, 1
      %p32 = por %p30, %p31
      %p34 = scmp.ne.s32.totalorder %s19, %s33
      %p35 = scmp.eq.s32.totalorder %s14, 0
      %p36 = por %p34, %p35
      %s37 = ssub.s32 %s8, %s15
      %p38 = scmp.eq.s32.totalorder %s37, 0
      %s40 = sadd.s32 %s39, 1
      %s41 = scalar_select %p38, %s39, %s40
      %p44 = pneg %p38
      %p45 = scmp.eq.s32.totalorder %s8, 1
      %p46 = por %p44, %p45
      %p47 = scmp.ne.s32.totalorder %s39, %s42
      %p48 = scmp.eq.s32.totalorder %s8, 0
      %p49 = por %p47, %p48
      %p50 = scmp.ne.s32.totalorder %s39, %s42
      %p51 = scmp.eq.s32.totalorder %s13, 1
      %p52 = por %p50, %p51
      %p53 = scmp.ne.s32.totalorder %s42, %s43
      %p54 = scmp.eq.s32.totalorder %s13, 0
      %p55 = por %p53, %p54
      %p56 = scmp.ne.s32.totalorder %s42, %s43
      %p57 = scmp.eq.s32.totalorder %s14, 1
      %p58 = por %p56, %p57
      %p60 = scmp.ne.s32.totalorder %s43, %s59
      %p61 = scmp.eq.s32.totalorder %s14, 0
      %p62 = por %p60, %p61
      %s63 = ssub.s32 %s8, %s15
      %p64 = scmp.eq.s32.totalorder %s63, 0
      %s66 = sadd.s32 %s65, 1
      %s67 = scalar_select %p64, %s65, %s66
      %p70 = pneg %p64
      %p71 = scmp.eq.s32.totalorder %s8, 1
      %p72 = por %p70, %p71
      %p73 = scmp.ne.s32.totalorder %s65, %s68
      %p74 = scmp.eq.s32.totalorder %s8, 0
      %p75 = por %p73, %p74
      %p76 = scmp.ne.s32.totalorder %s65, %s68
      %p77 = scmp.eq.s32.totalorder %s13, 1
      %p78 = por %p76, %p77
      %p79 = scmp.ne.s32.totalorder %s68, %s69
      %p80 = scmp.eq.s32.totalorder %s13, 0
      %p81 = por %p79, %p80
      %p82 = scmp.ne.s32.totalorder %s68, %s69
      %p83 = scmp.eq.s32.totalorder %s14, 1
      %p84 = por %p82, %p83
      %p86 = scmp.ne.s32.totalorder %s69, %s85
      %p87 = scmp.eq.s32.totalorder %s14, 0
      %p88 = por %p86, %p87
      %p89 = scmp.le.s32.totalorder 1, %s8
      %p90 = scmp.lt.s32.totalorder %s8, 3
      %p91 = pnand %p89, %p90
      %p92 = pneg %p91
      // Predicated region
      $region9: #{conv2d_3x3_pallas.1} parent=5 // pred_check
        _
      $region10: #{conv2d_3x3_pallas.1} parent=5 // pred_check_branch
        %94 = sbr.rel (%p91) target = $region12
      $region11: #{conv2d_3x3_pallas.1} parent=5 // pred_region
        %s95 = ssub.s32 %s8, 1
        // Predicated region
        $region13: #{conv2d_3x3_pallas.1} parent=11 // pred_check
          %p96 = pneg %p29
        $region14: #{conv2d_3x3_pallas.1} parent=11 // pred_check_branch
          %98 = sbr.rel (%p96) target = $region16
        $region15: #{conv2d_3x3_pallas.1} parent=11 // pred_region
          _
        $region16: #{conv2d_3x3_pallas.1} parent=11 // pred_fallthru
          _
      $region12: #{conv2d_3x3_pallas.1} parent=5 // pred_fallthru
        _
      %p99 = scmp.lt.s32.totalorder %s8, 2
      // Predicated region
      $region17: #{conv2d_3x3_pallas.1} parent=5 // pred_check
        %p100 = pneg %p99
      $region18: #{conv2d_3x3_pallas.1} parent=5 // pred_check_branch
        %102 = sbr.rel (%p100) target = $region20
      $region19: #{conv2d_3x3_pallas.1} parent=5 // pred_region
        // Predicated region
        $region21: #{conv2d_3x3_pallas.1} parent=19 // pred_check
          %p103 = pneg %p49
        $region22: #{conv2d_3x3_pallas.1} parent=19 // pred_check_branch
          %105 = sbr.rel (%p103) target = $region24
        $region23: #{conv2d_3x3_pallas.1} parent=19 // pred_region
          %s106 = sand.u32 %s39, 1
          %s107 = sand.u32 %s39, 1
          %s108 = smul.addr %s107, 32
          %s109 = scalar_lea.vmem [#allocation2], %s108
          %s110 = smul.u32 2, %s8
          %s111 = smul.addr %s110, 4
          %s112 = scalar_lea.vmem %s1, %s111
          // Predicated region
          $region25: #{conv2d_3x3_pallas.1} parent=23 // pred_check
            _
          $region26: #{conv2d_3x3_pallas.1} parent=23 // pred_check_branch
            %114 = sbr.rel (0) target = $region28
          $region27: #{conv2d_3x3_pallas.1} parent=23 // pred_region
            // Predicated region
            $region29: #{conv2d_3x3_pallas.1} parent=27 // pred_check
              _
            $region30: #{conv2d_3x3_pallas.1} parent=27 // pred_check_branch
              %116 = sbr.rel (0) target = $region32
            $region31: #{conv2d_3x3_pallas.1} parent=27 // pred_region
              // Predicated region
              $region44: #{conv2d_3x3_pallas.1} parent=31 // pred_check
                _
              $region45: #{conv2d_3x3_pallas.1} parent=31 // pred_check_branch
                %138 = sbr.rel (0) target = $region47
              $region46: #{conv2d_3x3_pallas.1} parent=31 // pred_region
                loop: start=0, step=1, limit=1
                $region48: #{conv2d_3x3_pallas.1} parent=46 // loop_pre_header
                  _
                $region49: #{conv2d_3x3_pallas.1} parent=46 // loop_header
                  %s140 = sphi 0, %s144
                  %p141 = scmp.ge.s32.totalorder %s140, 1
                  %s145 = sphi %s112, %s112
                  %s146 = sphi %s109, %s109
                $region50: #{conv2d_3x3_pallas.1} parent=46 // loop_header_branch
                  %143 = sbr.rel (%p141) target = $region54
                $region51: #{conv2d_3x3_pallas.1} parent=46 // loop_body
                  %v147 = vld [vmem:[%s145] sm:$0xff]
                  %148 = vst [vmem:[%s146] sm:$0xff] %v147
                  %v149 = vld [vmem:[%s145 + $0x10] sm:$0xff]
                  %150 = vst [vmem:[%s146 + $0x8] sm:$0xff] %v149
                  %v151 = vld [vmem:[%s145 + $0x20] sm:$0xff]
                  %152 = vst [vmem:[%s146 + $0x10] sm:$0xff] %v151
                  %v153 = vld [vmem:[%s145 + $0x30] sm:$0xff]
                  %154 = vst [vmem:[%s146 + $0x18] sm:$0xff] %v153
                $region52: #{conv2d_3x3_pallas.1} parent=46 // loop_footer
                  %s144 = sadd.s32 1, %s140
                $region53: #{conv2d_3x3_pallas.1} parent=46 // loop_footer_branch
                  %139 = sbr.rel target = $region49
                $region54: #{conv2d_3x3_pallas.1} parent=46 // loop_exit
                  _
              $region47: #{conv2d_3x3_pallas.1} parent=31 // pred_fallthru
                _
              // Predicated region
              $region55: #{conv2d_3x3_pallas.1} parent=31 // pred_check
                _
              $region56: #{conv2d_3x3_pallas.1} parent=31 // pred_check_branch
                %156 = sbr.rel target = $region58
              $region57: #{conv2d_3x3_pallas.1} parent=31 // pred_region
                _
              $region58: #{conv2d_3x3_pallas.1} parent=31 // pred_fallthru
                _
            $region32: #{conv2d_3x3_pallas.1} parent=27 // pred_fallthru
              _
            // Predicated region
            $region33: #{conv2d_3x3_pallas.1} parent=27 // pred_check
              _
            $region34: #{conv2d_3x3_pallas.1} parent=27 // pred_check_branch
              %118 = sbr.rel target = $region36
            $region35: #{conv2d_3x3_pallas.1} parent=27 // pred_region
              %s120 = ssub.s32 256, 1
              loop: start=0, step=1, limit=1
              $region37: #{conv2d_3x3_pallas.1} parent=35 // loop_pre_header
                _
              $region38: #{conv2d_3x3_pallas.1} parent=35 // loop_header
                %s122 = sphi 0, %s126
                %p123 = scmp.ge.s32.totalorder %s122, 1
                %s127 = sphi %s112, %s112
                %s128 = sphi %s109, %s109
              $region39: #{conv2d_3x3_pallas.1} parent=35 // loop_header_branch
                %125 = sbr.rel (%p123) target = $region43
              $region40: #{conv2d_3x3_pallas.1} parent=35 // loop_body
                %v129 = vld [vmem:[%s127] sm:%s120]
                %130 = vst [vmem:[%s128] sm:%s120] %v129
                %v131 = vld [vmem:[%s127 + $0x10] sm:%s120]
                %132 = vst [vmem:[%s128 + $0x8] sm:%s120] %v131
                %v133 = vld [vmem:[%s127 + $0x20] sm:%s120]
                %134 = vst [vmem:[%s128 + $0x10] sm:%s120] %v133
                %v135 = vld [vmem:[%s127 + $0x30] sm:%s120]
                %136 = vst [vmem:[%s128 + $0x18] sm:%s120] %v135
              $region41: #{conv2d_3x3_pallas.1} parent=35 // loop_footer
                %s126 = sadd.s32 1, %s122
              $region42: #{conv2d_3x3_pallas.1} parent=35 // loop_footer_branch
                %121 = sbr.rel target = $region38
              $region43: #{conv2d_3x3_pallas.1} parent=35 // loop_exit
                _
            $region36: #{conv2d_3x3_pallas.1} parent=27 // pred_fallthru
              _
          $region28: #{conv2d_3x3_pallas.1} parent=23 // pred_fallthru
            _
          %157 = vnop
        $region24: #{conv2d_3x3_pallas.1} parent=19 // pred_fallthru
          _
      $region20: #{conv2d_3x3_pallas.1} parent=5 // pred_fallthru
        _
      %p158 = scmp.le.s32.totalorder 1, %s8
      %p159 = scmp.lt.s32.totalorder %s8, 3
      %p160 = pnand %p158, %p159
      %p161 = pneg %p160
      // Predicated region
      $region59: #{conv2d_3x3_pallas.1} parent=5 // pred_check
        _
      $region60: #{conv2d_3x3_pallas.1} parent=5 // pred_check_branch
        %163 = sbr.rel (%p160) target = $region62
      $region61: #{conv2d_3x3_pallas.1} parent=5 // pred_region
        %s164 = ssub.s32 %s8, 1
        %s165 = sand.u32 %s42, 1
        %s166 = sand.u32 %s42, 1
        %s167 = smul.addr %s166, 32
        %s168 = scalar_lea.vmem [#allocation2], %s167
        // Predicated region
        $region63: #{conv2d_3x3_pallas.1} parent=61 // pred_check
          %p169 = pneg %p55
        $region64: #{conv2d_3x3_pallas.1} parent=61 // pred_check_branch
          %171 = sbr.rel (%p169) target = $region66
        $region65: #{conv2d_3x3_pallas.1} parent=61 // pred_region
          _
        $region66: #{conv2d_3x3_pallas.1} parent=61 // pred_fallthru
          _
        %p172 = pneg %p29
        %p173 = pneg %p26
        %s174 = sand.u32 %s42, 1
        %s175 = sand.u32 %s42, 1
        %s176 = smul.addr %s175, 32
        %s177 = scalar_lea.vmem [#allocation2], %s176
        %p178 = pneg %p55
        %p179 = pneg %p52
        %p180 = pneg %p81
        %p181 = pneg %p78
        %s182 = sand.u32 %s68, 1
        %s183 = sand.u32 %s68, 1
        %s184 = smul.addr %s183, 128
        %s185 = scalar_lea.vmem [#allocation3], %s184
        %s186 = smul.u32 2, %s13
        %s187 = smul.u32 2, %s13
        %v189 = vld [vmem:[%s0] sm:$0xf]
        %v190 = vld [vmem:[%s0 + $0x4] sm:$0xf]
        %v191 = vld [vmem:[%s0 + $0x8] sm:$0xf]
        %v192 = vld [vmem:[%s0 + $0xc] sm:$0xf]
        %v193 = vld [vmem:[%s0 + $0x10] sm:$0xf]
        %v194 = vld [vmem:[%s0 + $0x14] sm:$0xf]
        %v195 = vld [vmem:[%s0 + $0x18] sm:$0xf]
        %v196 = vld [vmem:[%s0 + $0x1c] sm:$0xf]
        %v197 = vld [vmem:[%s168] sm:$0xff]
        %v198 = vld [vmem:[%s168 + $0x8] sm:$0xff]
        %v199 = vld [vmem:[%s168 + $0x10] sm:$0xff]
        %v200 = vld [vmem:[%s168 + $0x18] sm:$0xff]
        %v209 = vunpack.c.l.b16 %v189
        %v210 = vunpack.c.l.b16 %v190
        %v211 = vunpack.c.l.b16 %v191
        %v212 = vunpack.c.l.b16 %v192
        %v213 = vunpack.c.l.b16 %v193
        %v214 = vunpack.c.l.b16 %v194
        %v215 = vunpack.c.l.b16 %v195
        %v216 = vunpack.c.l.b16 %v196
        %v217 = vpack.c.b16 %v210, %v209
        %v218 = vpack.c.b16 %v212, %v211
        %v219 = vpack.c.b16 %v214, %v213
        %v220 = vpack.c.b16 %v216, %v215
        %v225 = vunpack.c.l.b16 %v197
        %v226 = vunpack.c.h.b16 %v197
        %v227 = vunpack.c.l.b16 %v198
        %v228 = vunpack.c.h.b16 %v198
        %v229 = vunpack.c.l.b16 %v199
        %v230 = vunpack.c.h.b16 %v199
        %v231 = vunpack.c.l.b16 %v200
        %v232 = vunpack.c.h.b16 %v200
        %v233 = vpack.c.b16 %v227, %v225
        %v234 = vpack.c.b16 %v228, %v226
        %v235 = vpack.c.b16 %v231, %v229
        %v236 = vpack.c.b16 %v232, %v230
        %vm241 = vcmask 261120
        %v243 = vsel %vm241, %v217, 0
        %v246 = vsel %vm241, %v218, 0
        %v249 = vsel %vm241, %v219, 0
        %v252 = vsel %vm241, %v220, 0
        %254 = vmatprep.subr.bf16.mxu0 0
        %255 = vmatpush1.bf16.msra.mxu0 0
        %256 = vmatprep.subr.bf16.mxu0 0
        %257 = vmatpush1.bf16.msra.mxu0 0
        %258 = vmatprep.subr.bf16.mxu0 0
        %259 = vmatpush1.bf16.msra.mxu0 0
        %260 = vmatprep.subr.bf16.mxu0 0
        %261 = vmatpush1.bf16.msra.mxu0 0
        %262 = vmatprep.subr.bf16.mxu0 0
        %263 = vmatpush1.bf16.msra.mxu0 0
        %264 = vmatprep.subr.bf16.mxu0 0
        %265 = vmatpush1.bf16.msra.mxu0 0
        %266 = vmatprep.subr.bf16.mxu0 %v236
        %267 = vmatpush1.bf16.msra.mxu0 %v235
        %268 = vmatprep.subr.bf16.mxu0 %v234
        %269 = vmatpush1.bf16.msra.mxu0 %v233
        %270 = vmatprep.subr.bf16.mxu0 0
        %271 = vmatpush2.bf16.msra.mxu0 0
        %272 = vmatprep.subr.bf16.mxu0 0
        %273 = vmatpush2.bf16.msra.mxu0 0
        %274 = vmatprep.subr.bf16.mxu0 0
        %275 = vmatpush2.bf16.msra.mxu0 0
        %276 = vmatprep.subr.bf16.mxu0 0
        %277 = vmatpush2.bf16.msra.mxu0 0
        %278 = vmatprep.subr.bf16.mxu0 0
        %279 = vmatpush2.bf16.msra.mxu0 0
        %280 = vmatprep.subr.bf16.mxu0 0
        %281 = vmatpush2.bf16.msra.mxu0 0
        %282 = vmatprep.subr.bf16.mxu0 0
        %283 = vmatpush2.bf16.msra.mxu0 0
        %284 = vmatprep.subr.bf16.mxu0 0
        %285 = vmatpush2.bf16.msra.mxu0 0
        %286 = vmatprep.mubr.bf16.mxu0 0
        %287 = vmatmul.mubr.bf16.gmra.mxu0 %v243
        %v288 = vpop.f32.mrf.mxu0
        %v289 = vadd.f32 0.0, %v288
        %v290 = vpop.f32.mrf.mxu0
        %v291 = vadd.f32 0.0, %v290
        %v292 = vpop.f32.mrf.mxu0
        %v293 = vadd.f32 0.0, %v292
        %v294 = vpop.f32.mrf.mxu0
        %v295 = vadd.f32 0.0, %v294
        %296 = vmatprep.mubr.bf16.mxu0 0
        %297 = vmatmul.mubr.bf16.gmra.mxu0 %v246
        %v298 = vpop.f32.mrf.mxu0
        %v299 = vadd.f32 0.0, %v298
        %v300 = vpop.f32.mrf.mxu0
        %v301 = vadd.f32 0.0, %v300
        %v302 = vpop.f32.mrf.mxu0
        %v303 = vadd.f32 0.0, %v302
        %v304 = vpop.f32.mrf.mxu0
        %v305 = vadd.f32 0.0, %v304
        %306 = vmatprep.mubr.bf16.mxu0 0
        %307 = vmatmul.mubr.bf16.gmra.mxu0 %v249
        %v308 = vpop.f32.mrf.mxu0
        %v309 = vadd.f32 0.0, %v308
        %v310 = vpop.f32.mrf.mxu0
        %v311 = vadd.f32 0.0, %v310
        %v312 = vpop.f32.mrf.mxu0
        %v313 = vadd.f32 0.0, %v312
        %v314 = vpop.f32.mrf.mxu0
        %v315 = vadd.f32 0.0, %v314
        %316 = vmatprep.mubr.bf16.mxu0 0
        %317 = vmatmul.mubr.bf16.gmra.mxu0 %v252
        %v318 = vpop.f32.mrf.mxu0
        %v319 = vadd.f32 0.0, %v318
        %v320 = vpop.f32.mrf.mxu0
        %v321 = vadd.f32 0.0, %v320
        %v322 = vpop.f32.mrf.mxu0
        %v323 = vadd.f32 0.0, %v322
        %v324 = vpop.f32.mrf.mxu0
        %v325 = vadd.f32 0.0, %v324
        %326 = vdwg.mxu0
        %327 = vst [vmem:[%s185] sm:$0xff] %v289
        %328 = vst [vmem:[%s185 + $0x8] sm:$0xff] %v291
        %329 = vst [vmem:[%s185 + $0x10] sm:$0xff] %v293
        %330 = vst [vmem:[%s185 + $0x18] sm:$0xff] %v295
        %331 = vst [vmem:[%s185 + $0x20] sm:$0xff] %v299
        %332 = vst [vmem:[%s185 + $0x28] sm:$0xff] %v301
        %333 = vst [vmem:[%s185 + $0x30] sm:$0xff] %v303
        %334 = vst [vmem:[%s185 + $0x38] sm:$0xff] %v305
        %335 = vst [vmem:[%s185 + $0x40] sm:$0xff] %v309
        %336 = vst [vmem:[%s185 + $0x48] sm:$0xff] %v311
        %337 = vst [vmem:[%s185 + $0x50] sm:$0xff] %v313
        %338 = vst [vmem:[%s185 + $0x58] sm:$0xff] %v315
        %339 = vst [vmem:[%s185 + $0x60] sm:$0xff] %v319
        %340 = vst [vmem:[%s185 + $0x68] sm:$0xff] %v321
        %341 = vst [vmem:[%s185 + $0x70] sm:$0xff] %v323
        %342 = vst [vmem:[%s185 + $0x78] sm:$0xff] %v325
        %s343 = sand.u32 %s68, 1
        %s344 = sand.u32 %s68, 1
        %s345 = smul.addr %s344, 128
        %s346 = scalar_lea.vmem [#allocation3], %s345
        // Predicated region
        $region67: #{conv2d_3x3_pallas.1} parent=61 // pred_check
          %p347 = pneg %p78
        $region68: #{conv2d_3x3_pallas.1} parent=61 // pred_check_branch
          %349 = sbr.rel (%p347) target = $region70
        $region69: #{conv2d_3x3_pallas.1} parent=61 // pred_region
          %s350 = smul.u32 2, %s13
          %s351 = smul.addr %s350, 8
          %s352 = scalar_lea.vmem %s2, %s351
          // Predicated region
          $region71: #{conv2d_3x3_pallas.1} parent=69 // pred_check
            _
          $region72: #{conv2d_3x3_pallas.1} parent=69 // pred_check_branch
            %354 = sbr.rel (0) target = $region74
          $region73: #{conv2d_3x3_pallas.1} parent=69 // pred_region
            // Predicated region
            $region75: #{conv2d_3x3_pallas.1} parent=73 // pred_check
              _
            $region76: #{conv2d_3x3_pallas.1} parent=73 // pred_check_branch
              %356 = sbr.rel (0) target = $region78
            $region77: #{conv2d_3x3_pallas.1} parent=73 // pred_region
              loop: start=0, step=1, limit=1
              $region79: #{conv2d_3x3_pallas.1} parent=77 // loop_pre_header
                _
              $region80: #{conv2d_3x3_pallas.1} parent=77 // loop_header
                %s358 = sphi 0, %s362
                %p359 = scmp.ge.s32.totalorder %s358, 1
                %s363 = sphi %s346, %s346
                %s364 = sphi %s352, %s352
              $region81: #{conv2d_3x3_pallas.1} parent=77 // loop_header_branch
                %361 = sbr.rel (%p359) target = $region85
              $region82: #{conv2d_3x3_pallas.1} parent=77 // loop_body
                %v365 = vld [vmem:[%s363] sm:$0xff]
                %366 = vst [vmem:[%s364] sm:$0xff] %v365
                %v367 = vld [vmem:[%s363 + $0x8] sm:$0xff]
                %368 = vst [vmem:[%s364 + $0x8] sm:$0xff] %v367
                %v369 = vld [vmem:[%s363 + $0x10] sm:$0xff]
                %370 = vst [vmem:[%s364 + $0x20] sm:$0xff] %v369
                %v371 = vld [vmem:[%s363 + $0x18] sm:$0xff]
                %372 = vst [vmem:[%s364 + $0x28] sm:$0xff] %v371
                %v373 = vld [vmem:[%s363 + $0x20] sm:$0xff]
                %374 = vst [vmem:[%s364 + $0x40] sm:$0xff] %v373
                %v375 = vld [vmem:[%s363 + $0x28] sm:$0xff]
                %376 = vst [vmem:[%s364 + $0x48] sm:$0xff] %v375
                %v377 = vld [vmem:[%s363 + $0x30] sm:$0xff]
                %378 = vst [vmem:[%s364 + $0x60] sm:$0xff] %v377
                %v379 = vld [vmem:[%s363 + $0x38] sm:$0xff]
                %380 = vst [vmem:[%s364 + $0x68] sm:$0xff] %v379
                %v381 = vld [vmem:[%s363 + $0x40] sm:$0xff]
                %382 = vst [vmem:[%s364 + $0x80] sm:$0xff] %v381
                %v383 = vld [vmem:[%s363 + $0x48] sm:$0xff]
                %384 = vst [vmem:[%s364 + $0x88] sm:$0xff] %v383
                %v385 = vld [vmem:[%s363 + $0x50] sm:$0xff]
                %386 = vst [vmem:[%s364 + $0xa0] sm:$0xff] %v385
                %v387 = vld [vmem:[%s363 + $0x58] sm:$0xff]
                %388 = vst [vmem:[%s364 + $0xa8] sm:$0xff] %v387
                %v389 = vld [vmem:[%s363 + $0x60] sm:$0xff]
                %390 = vst [vmem:[%s364 + $0xc0] sm:$0xff] %v389
                %v391 = vld [vmem:[%s363 + $0x68] sm:$0xff]
                %392 = vst [vmem:[%s364 + $0xc8] sm:$0xff] %v391
                %v393 = vld [vmem:[%s363 + $0x70] sm:$0xff]
                %394 = vst [vmem:[%s364 + $0xe0] sm:$0xff] %v393
                %v395 = vld [vmem:[%s363 + $0x78] sm:$0xff]
                %396 = vst [vmem:[%s364 + $0xe8] sm:$0xff] %v395
              $region83: #{conv2d_3x3_pallas.1} parent=77 // loop_footer
                %s362 = sadd.s32 1, %s358
              $region84: #{conv2d_3x3_pallas.1} parent=77 // loop_footer_branch
                %357 = sbr.rel target = $region80
              $region85: #{conv2d_3x3_pallas.1} parent=77 // loop_exit
                _
            $region78: #{conv2d_3x3_pallas.1} parent=73 // pred_fallthru
              _
            // Predicated region
            $region86: #{conv2d_3x3_pallas.1} parent=73 // pred_check
              _
            $region87: #{conv2d_3x3_pallas.1} parent=73 // pred_check_branch
              %398 = sbr.rel target = $region89
            $region88: #{conv2d_3x3_pallas.1} parent=73 // pred_region
              _
            $region89: #{conv2d_3x3_pallas.1} parent=73 // pred_fallthru
              _
          $region74: #{conv2d_3x3_pallas.1} parent=69 // pred_fallthru
            _
          %399 = vnop
        $region70: #{conv2d_3x3_pallas.1} parent=61 // pred_fallthru
          _
      $region62: #{conv2d_3x3_pallas.1} parent=5 // pred_fallthru
        _
      %p400 = scmp.le.s32.totalorder 2, %s8
      // Predicated region
      $region90: #{conv2d_3x3_pallas.1} parent=5 // pred_check
        %p401 = pneg %p400
      $region91: #{conv2d_3x3_pallas.1} parent=5 // pred_check_branch
        %403 = sbr.rel (%p401) target = $region93
      $region92: #{conv2d_3x3_pallas.1} parent=5 // pred_region
        %s404 = ssub.s32 %s8, 2
        // Predicated region
        $region94: #{conv2d_3x3_pallas.1} parent=92 // pred_check
          %p405 = pneg %p84
        $region95: #{conv2d_3x3_pallas.1} parent=92 // pred_check_branch
          %407 = sbr.rel (%p405) target = $region97
        $region96: #{conv2d_3x3_pallas.1} parent=92 // pred_region
          %s408 = sand.u32 %s69, 1
          %s409 = sand.u32 %s69, 1
          %s410 = smul.addr %s409, 128
          %s411 = scalar_lea.vmem [#allocation3], %s410
        $region97: #{conv2d_3x3_pallas.1} parent=92 // pred_fallthru
          _
      $region93: #{conv2d_3x3_pallas.1} parent=5 // pred_fallthru
        _
    $region6: #{conv2d_3x3_pallas.1} parent=1 // loop_footer
      %s12 = sadd.s32 1, %s8
    $region7: #{conv2d_3x3_pallas.1} parent=1 // loop_footer_branch
      %7 = sbr.rel target = $region3
    $region8: #{conv2d_3x3_pallas.1} parent=1 // loop_exit
      _

</llo_original>
